<compile_context>
chip_gen: v7x
topology: tpu7x:2x2x1
jax: 0.10.0
libtpu: 0.0.40
codegen_flags: <defaults>
</compile_context>

<pallas_src>
import jax
import jax.numpy as jnp
from jax import lax
from jax.experimental import pallas as pl
from jax.experimental.pallas import tpu as pltpu


def _make_fuser_kernel(H, W, HW, TN, C3, mm_dtype):
    def kernel(xy_ref, g_ref, f3d_ref, w3_ref, b_ref, out_ref):
        # xy_ref : [2, TN]  f32   pixel coords (row 0 = x, row 1 = y)
        # g_ref  : [C3, HW] mm    G = W2 @ F2d, resident across N tiles
        # f3d_ref: [C3, TN] mm
        # w3_ref : [C3, C3] mm    b_ref: [C3, 1] f32
        # out_ref: [C3, TN] f32

        # ---- bilinear sampling matrix S[HW, TN], built separably in f32 -----
        x = xy_ref[0:1, :]                       # [1, TN]
        y = xy_ref[1:2, :]                       # [1, TN]
        x0f = jnp.floor(x)
        y0f = jnp.floor(y)
        x0 = x0f.astype(jnp.int32)
        y0 = y0f.astype(jnp.int32)
        wx = x - x0f                             # [1, TN] in [0, 1)
        wy = y - y0f

        # Row / column one-hot selectors.  Out-of-image corners never match the
        # iota (no clipping), reproducing grid_sample's zero padding exactly.
        iota_h = lax.broadcasted_iota(jnp.int32, (H, TN), 0)
        iota_w = lax.broadcasted_iota(jnp.int32, (W, TN), 0)
        wy_sel = (jnp.where(iota_h == y0, 1.0 - wy, 0.0)
                  + jnp.where(iota_h == y0 + 1, wy, 0.0))        # [H, TN] f32
        wx_sel = (jnp.where(iota_w == x0, 1.0 - wx, 0.0)
                  + jnp.where(iota_w == x0 + 1, wx, 0.0))        # [W, TN] f32

        # Single full-size VPU multiply; f32 reshape [H,W,TN]->[HW,TN] is
        # layout-free when W % 8 == 0.  Cast to the MXU dtype once.
        s = (wy_sel[:, None, :] * wx_sel[None, :, :]).reshape(HW, TN)
        s = s.astype(mm_dtype)

        # ---- gather-as-matmul + fused 1x1 conv + LeakyReLU(0.1) -------------
        acc = jnp.dot(g_ref[...], s, preferred_element_type=jnp.float32)
        acc = acc + jnp.dot(w3_ref[...], f3d_ref[...],
                            preferred_element_type=jnp.float32)
        acc = acc + b_ref[...]
        out_ref[...] = jnp.where(acc >= 0.0, acc, 0.1 * acc).astype(out_ref.dtype)

    return kernel


def _auto_tile_n(HW, N, mm_bytes, s_budget_bytes=24 * 1024 * 1024):
    """Largest multiple of 128 such that the in-kernel S temporaries
    (f32 outer product + mm_dtype copy) fit the budget; capped at 2048 and
    never wider than needed for N."""
    per_col = HW * (4 + mm_bytes)
    cap = max(128, min(2048, (s_budget_bytes // per_col) // 128 * 128))
    need = 128 * pl.cdiv(N, 128)
    return int(min(cap, need))


def decoder_feature_fuser_3d(xy, feat_2d, feat_3d, weight, bias, *,
                             tile_n=None, mm_dtype=jnp.bfloat16):
    """xy: [B,2,N] pixel coords (align_corners=True un-normalized);
    feat_2d: [B,C2,H,W]; feat_3d: [B,C3,N];
    weight: [C3, C2+C3] (Conv1d k=1 weight, squeezed); bias: [C3]."""
    B, C2, H, W = feat_2d.shape
    _, C3, N = feat_3d.shape
    HW = H * W
    mm_bytes = jnp.dtype(mm_dtype).itemsize

    if tile_n is None:
        tile_n = _auto_tile_n(HW, N, mm_bytes)

    n_tiles = pl.cdiv(N, tile_n)
    n_pad = n_tiles * tile_n
    pad = n_pad - N

    xy_p = jnp.pad(xy.astype(jnp.float32), ((0, 0), (0, 0), (0, pad)))
    f3d = jnp.pad(feat_3d, ((0, 0), (0, 0), (0, pad))).astype(mm_dtype)

    # Hoisted per-batch constant: G = W2 @ F2d (1x1-conv reassociation),
    # computed in f32 by XLA, single-rounded to the MXU dtype.
    w2 = weight[:, :C2].astype(jnp.float32)
    g = jnp.einsum('oc,bcp->bop', w2,
                   feat_2d.reshape(B, C2, HW).astype(jnp.float32)).astype(mm_dtype)

    w3 = weight[:, C2:].astype(mm_dtype)            # [C3, C3]
    b2 = bias.reshape(C3, 1).astype(jnp.float32)    # [C3, 1]

    kernel = _make_fuser_kernel(H, W, HW, tile_n, C3, mm_dtype)

    # VMEM: S temporaries + double-buffered per-tile streams + resident G.
    # Cap at 64 MiB so the limit is valid on v7x as well as v5e/v6e.
    est = (HW * tile_n * (4 + mm_bytes)             # S (f32 build + mm copy)
           + 2 * C3 * HW * mm_bytes                 # G (double-buffered)
           + 2 * 2 * tile_n * 4                     # xy
           + 2 * C3 * tile_n * mm_bytes             # f3d
           + 2 * C3 * tile_n * 4                    # out
           + 2 * (C3 * C3 * mm_bytes + C3 * 4))     # w3 + b
    vmem_limit = int(min(64 * 1024 * 1024, max(32 * 1024 * 1024, 2 * est)))

    cost = pl.CostEstimate(
        flops=2 * B * n_pad * (C3 * HW + C3 * C3),
        transcendentals=0,
        bytes_accessed=(xy_p.size * 4 + g.size * mm_bytes + f3d.size * mm_bytes
                        + B * C3 * n_pad * 4
                        + w3.size * mm_bytes + b2.size * 4),
    )

    out = pl.pallas_call(
        kernel,
        out_shape=jax.ShapeDtypeStruct((B, C3, n_pad), jnp.float32),
        grid=(B, n_tiles),
        in_specs=[
            pl.BlockSpec((None, 2, tile_n), lambda b, nt: (b, 0, nt)),
            pl.BlockSpec((None, C3, HW), lambda b, nt: (b, 0, 0)),   # resident over nt
            pl.BlockSpec((None, C3, tile_n), lambda b, nt: (b, 0, nt)),
            pl.BlockSpec((C3, C3), lambda b, nt: (0, 0)),            # loaded once
            pl.BlockSpec((C3, 1), lambda b, nt: (0, 0)),
        ],
        out_specs=pl.BlockSpec((None, C3, tile_n), lambda b, nt: (b, 0, nt)),
        compiler_params=pltpu.CompilerParams(
            # G hoist removed the per-batch serial dependency: both axes are
            # independent, so v7x can split either axis across its two TCs.
            dimension_semantics=("parallel", "parallel"),
            vmem_limit_bytes=vmem_limit,
        ),
        cost_estimate=cost,
    )(xy_p, g, f3d, w3, b2)

    return out[:, :, :N]


# ---------------- pure-JAX reference (for correctness check) ----------------
def _bilinear_sample_ref(feat, xy):
    # feat: [B, C, H, W], xy: [B, 2, N] pixel coords
    B, C, H, W = feat.shape

    def one(feat_b, xy_b):
        x, y = xy_b[0], xy_b[1]
        x0f, y0f = jnp.floor(x), jnp.floor(y)
        x0, y0 = x0f.astype(jnp.int32), y0f.astype(jnp.int32)
        x1, y1 = x0 + 1, y0 + 1
        wx, wy = x - x0f, y - y0f

        def g(xi, yi):
            valid = ((xi >= 0) & (xi <= W - 1) & (yi >= 0) & (yi <= H - 1))
            xc = jnp.clip(xi, 0, W - 1)
            yc = jnp.clip(yi, 0, H - 1)
            vals = feat_b[:, yc, xc]                 # [C, N]
            return vals * valid.astype(feat_b.dtype)[None, :]

        return (g(x0, y0) * ((1 - wx) * (1 - wy))[None, :]
                + g(x1, y0) * (wx * (1 - wy))[None, :]
                + g(x0, y1) * ((1 - wx) * wy)[None, :]
                + g(x1, y1) * (wx * wy)[None, :])

    return jax.vmap(one)(feat, xy)                   # [B, C, N]


def reference(xy, feat_2d, feat_3d, weight, bias):
    sampled = _bilinear_sample_ref(feat_2d, xy)                    # [B, C2, N]
    cat = jnp.concatenate([sampled, feat_3d], axis=1)              # [B, C2+C3, N]
    out = jnp.einsum('oc,bcn->bon', weight, cat) + bias[None, :, None]
    return jnp.where(out >= 0.0, out, 0.1 * out)


if __name__ == "__main__":
    key = jax.random.PRNGKey(0)
    B, C2, C3 = 2, 4, 8
    H, W, N = 16, 16, 200        # N not a multiple of 128: exercises padding

    k1, k2, k3, k4, k5 = jax.random.split(key, 5)
    feat_2d = jax.random.normal(k1, (B, C2, H, W), dtype=jnp.float32)
    feat_3d = jax.random.normal(k2, (B, C3, N), dtype=jnp.float32)
    # pixel coordinates, some deliberately outside the image to exercise the
    # grid_sample zero-padding path.
    xy_x = jax.random.uniform(k3, (B, 1, N), minval=-2.0, maxval=W + 1.0)
    xy_y = jax.random.uniform(k4, (B, 1, N), minval=-2.0, maxval=H + 1.0)
    xy = jnp.concatenate([xy_x, xy_y], axis=1)                     # [B, 2, N]

    # deterministic Conv1d(C2+C3 -> C3, k=1) parameters
    wk, bk = jax.random.split(k5)
    weight = 0.1 * jax.random.normal(wk, (C3, C2 + C3), dtype=jnp.float32)
    bias = 0.1 * jax.random.normal(bk, (C3,), dtype=jnp.float32)

    out = decoder_feature_fuser_3d(xy, feat_2d, feat_3d, weight, bias)
    out = jax.block_until_ready(out)

    ref = reference(xy, feat_2d, feat_3d, weight, bias)
    assert out.shape == (B, C3, N)
    err = jnp.max(jnp.abs(out - ref))
    # bf16 MXU operands (f32 accumulation) -> looser tolerance than pure f32.
    assert jnp.allclose(out, ref, atol=3e-2, rtol=3e-2), f"max abs err {err}"

    print("KERNEL_OK")
</pallas_src>

<mosaic_0001>
module attributes {stable_mosaic.version = 11 : i64} {
  func.func @kernel(%arg0: i32, %arg1: i32, %arg2: memref<1x2x256xf32, #tpu.memory_space<vmem>>, %arg3: memref<1x8x256xbf16, #tpu.memory_space<vmem>>, %arg4: memref<1x8x256xbf16, #tpu.memory_space<vmem>>, %arg5: memref<8x8xbf16, #tpu.memory_space<vmem>>, %arg6: memref<8x1xf32, #tpu.memory_space<vmem>>, %arg7: memref<1x8x256xf32, #tpu.memory_space<vmem>>) attributes {dimension_semantics = [#tpu.dimension_semantics<parallel>, #tpu.dimension_semantics<parallel>], iteration_bounds = array<i64: 2, 1>, scalar_prefetch = 0 : i64, scratch_operands = 0 : i64, tpu.core_type = #tpu.core_type<tc>, window_params = [{transform_indices = @transform_0, window_bounds = array<i64: 1, 2, 256>}, {transform_indices = @transform_1, window_bounds = array<i64: 1, 8, 256>}, {transform_indices = @transform_2, window_bounds = array<i64: 1, 8, 256>}, {pipeline_mode = #tpu.pipeline_mode<synchronous>, transform_indices = @transform_3, window_bounds = array<i64: 8, 8>}, {pipeline_mode = #tpu.pipeline_mode<synchronous>, transform_indices = @transform_4, window_bounds = array<i64: 8, 1>}, {transform_indices = @transform_5, window_bounds = array<i64: 1, 8, 256>}]} {
    %c0 = arith.constant 0 : index
    %c0_0 = arith.constant 0 : index
    %c0_1 = arith.constant 0 : index
    %0 = vector.load %arg2[%c0, %c0_0, %c0_1] : memref<1x2x256xf32, #tpu.memory_space<vmem>>, vector<1x1x256xf32>
    %1 = vector.shape_cast %0 : vector<1x1x256xf32> to vector<1x256xf32>
    %c0_2 = arith.constant 0 : index
    %c1 = arith.constant 1 : index
    %c0_3 = arith.constant 0 : index
    %2 = vector.load %arg2[%c0_2, %c1, %c0_3] : memref<1x2x256xf32, #tpu.memory_space<vmem>>, vector<1x1x256xf32>
    %3 = vector.shape_cast %2 : vector<1x1x256xf32> to vector<1x256xf32>
    %4 = math.floor %1 : vector<1x256xf32>
    %5 = math.floor %3 : vector<1x256xf32>
    %6 = arith.fptosi %4 : vector<1x256xf32> to vector<1x256xi32>
    %7 = arith.fptosi %5 : vector<1x256xf32> to vector<1x256xi32>
    %8 = arith.subf %1, %4 : vector<1x256xf32>
    %9 = arith.subf %3, %5 : vector<1x256xf32>
    %10 = tpu.iota {dimensions = array<i32: 0>} : vector<16x256xi32>
    %11 = tpu.iota {dimensions = array<i32: 0>} : vector<16x256xi32>
    %12 = vector.broadcast %7 : vector<1x256xi32> to vector<16x256xi32>
    %13 = arith.cmpi eq, %10, %12 : vector<16x256xi32>
    %cst = arith.constant 1.000000e+00 : f32
    %14 = vector.broadcast %cst : f32 to vector<1x256xf32>
    %15 = arith.subf %14, %9 : vector<1x256xf32>
    %cst_4 = arith.constant 0.000000e+00 : f32
    %16 = vector.shape_cast %15 : vector<1x256xf32> to vector<1x256xf32>
    %17 = vector.broadcast %16 : vector<1x256xf32> to vector<16x256xf32>
    %18 = vector.broadcast %cst_4 : f32 to vector<16x256xf32>
    %19 = arith.select %13, %17, %18 : vector<16x256xi1>, vector<16x256xf32>
    %c1_i32 = arith.constant 1 : i32
    %20 = vector.broadcast %c1_i32 : i32 to vector<1x256xi32>
    %21 = arith.addi %7, %20 : vector<1x256xi32>
    %22 = vector.broadcast %21 : vector<1x256xi32> to vector<16x256xi32>
    %23 = arith.cmpi eq, %10, %22 : vector<16x256xi32>
    %cst_5 = arith.constant 0.000000e+00 : f32
    %24 = vector.shape_cast %9 : vector<1x256xf32> to vector<1x256xf32>
    %25 = vector.broadcast %24 : vector<1x256xf32> to vector<16x256xf32>
    %26 = vector.broadcast %cst_5 : f32 to vector<16x256xf32>
    %27 = arith.select %23, %25, %26 : vector<16x256xi1>, vector<16x256xf32>
    %28 = arith.addf %19, %27 : vector<16x256xf32>
    %29 = vector.broadcast %6 : vector<1x256xi32> to vector<16x256xi32>
    %30 = arith.cmpi eq, %11, %29 : vector<16x256xi32>
    %cst_6 = arith.constant 1.000000e+00 : f32
    %31 = vector.broadcast %cst_6 : f32 to vector<1x256xf32>
    %32 = arith.subf %31, %8 : vector<1x256xf32>
    %cst_7 = arith.constant 0.000000e+00 : f32
    %33 = vector.shape_cast %32 : vector<1x256xf32> to vector<1x256xf32>
    %34 = vector.broadcast %33 : vector<1x256xf32> to vector<16x256xf32>
    %35 = vector.broadcast %cst_7 : f32 to vector<16x256xf32>
    %36 = arith.select %30, %34, %35 : vector<16x256xi1>, vector<16x256xf32>
    %c1_i32_8 = arith.constant 1 : i32
    %37 = vector.broadcast %c1_i32_8 : i32 to vector<1x256xi32>
    %38 = arith.addi %6, %37 : vector<1x256xi32>
    %39 = vector.broadcast %38 : vector<1x256xi32> to vector<16x256xi32>
    %40 = arith.cmpi eq, %11, %39 : vector<16x256xi32>
    %cst_9 = arith.constant 0.000000e+00 : f32
    %41 = vector.shape_cast %8 : vector<1x256xf32> to vector<1x256xf32>
    %42 = vector.broadcast %41 : vector<1x256xf32> to vector<16x256xf32>
    %43 = vector.broadcast %cst_9 : f32 to vector<16x256xf32>
    %44 = arith.select %40, %42, %43 : vector<16x256xi1>, vector<16x256xf32>
    %45 = arith.addf %36, %44 : vector<16x256xf32>
    %46 = vector.shape_cast %28 : vector<16x256xf32> to vector<16x1x256xf32>
    %47 = vector.shape_cast %45 : vector<16x256xf32> to vector<1x16x256xf32>
    %48 = vector.broadcast %46 : vector<16x1x256xf32> to vector<16x16x256xf32>
    %49 = vector.broadcast %47 : vector<1x16x256xf32> to vector<16x16x256xf32>
    %50 = arith.mulf %48, %49 : vector<16x16x256xf32>
    %51 = vector.shape_cast %50 : vector<16x16x256xf32> to vector<256x256xf32>
    %52 = arith.truncf %51 : vector<256x256xf32> to vector<256x256xbf16>
    %c0_10 = arith.constant 0 : index
    %c0_11 = arith.constant 0 : index
    %c0_12 = arith.constant 0 : index
    %53 = vector.load %arg3[%c0_10, %c0_11, %c0_12] : memref<1x8x256xbf16, #tpu.memory_space<vmem>>, vector<1x8x256xbf16>
    %54 = vector.shape_cast %53 : vector<1x8x256xbf16> to vector<8x256xbf16>
    %cst_13 = arith.constant dense<0.000000e+00> : vector<8x256xf32>
    %55 = tpu.matmul %54, %52, %cst_13 {dimension_numbers = #tpu.dot_dimension_numbers<[1], [0], [0], [1], [0, 0, 1, 1], [], []>} : vector<8x256xbf16>, vector<256x256xbf16>, vector<8x256xf32> -> vector<8x256xf32>
    %c0_14 = arith.constant 0 : index
    %c0_15 = arith.constant 0 : index
    %56 = vector.load %arg5[%c0_14, %c0_15] : memref<8x8xbf16, #tpu.memory_space<vmem>>, vector<8x8xbf16>
    %c0_16 = arith.constant 0 : index
    %c0_17 = arith.constant 0 : index
    %c0_18 = arith.constant 0 : index
    %57 = vector.load %arg4[%c0_16, %c0_17, %c0_18] : memref<1x8x256xbf16, #tpu.memory_space<vmem>>, vector<1x8x256xbf16>
    %58 = vector.shape_cast %57 : vector<1x8x256xbf16> to vector<8x256xbf16>
    %cst_19 = arith.constant dense<0.000000e+00> : vector<8x256xf32>
    %59 = tpu.matmul %56, %58, %cst_19 {dimension_numbers = #tpu.dot_dimension_numbers<[1], [0], [0], [1], [0, 0, 1, 1], [], []>} : vector<8x8xbf16>, vector<8x256xbf16>, vector<8x256xf32> -> vector<8x256xf32>
    %60 = arith.addf %55, %59 : vector<8x256xf32>
    %c0_20 = arith.constant 0 : index
    %c0_21 = arith.constant 0 : index
    %61 = vector.load %arg6[%c0_20, %c0_21] : memref<8x1xf32, #tpu.memory_space<vmem>>, vector<8x1xf32>
    %62 = vector.broadcast %61 : vector<8x1xf32> to vector<8x256xf32>
    %63 = arith.addf %60, %62 : vector<8x256xf32>
    %cst_22 = arith.constant 0.000000e+00 : f32
    %64 = vector.broadcast %cst_22 : f32 to vector<8x256xf32>
    %65 = arith.cmpf oge, %63, %64 : vector<8x256xf32>
    %cst_23 = arith.constant 1.000000e-01 : f32
    %66 = vector.broadcast %cst_23 : f32 to vector<8x256xf32>
    %67 = arith.mulf %66, %63 : vector<8x256xf32>
    %68 = arith.select %65, %63, %67 : vector<8x256xi1>, vector<8x256xf32>
    %c0_24 = arith.constant 0 : index
    %c0_25 = arith.constant 0 : index
    %c0_26 = arith.constant 0 : index
    %69 = vector.load %arg7[%c0_24, %c0_25, %c0_26] : memref<1x8x256xf32, #tpu.memory_space<vmem>>, vector<1x8x256xf32>
    %70 = vector.shape_cast %69 : vector<1x8x256xf32> to vector<8x256xf32>
    %71 = vector.shape_cast %68 : vector<8x256xf32> to vector<1x8x256xf32>
    tpu.vector_store %arg7[%c0_24, %c0_25, %c0_26], %71 {strides = array<i32>} : memref<1x8x256xf32, #tpu.memory_space<vmem>>, vector<1x8x256xf32>,
    return
  }
  func.func @transform_0(%arg0: i32, %arg1: i32) -> (i32, i32, i32) {
    %c0_i32 = arith.constant 0 : i32
    %c0_i32_0 = arith.constant 0 : i32
    return %arg0, %c0_i32, %arg1 : i32, i32, i32
  }
  func.func @transform_1(%arg0: i32, %arg1: i32) -> (i32, i32, i32) {
    %c0_i32 = arith.constant 0 : i32
    %c0_i32_0 = arith.constant 0 : i32
    %c0_i32_1 = arith.constant 0 : i32
    return %arg0, %c0_i32, %c0_i32_0 : i32, i32, i32
  }
  func.func @transform_2(%arg0: i32, %arg1: i32) -> (i32, i32, i32) {
    %c0_i32 = arith.constant 0 : i32
    %c0_i32_0 = arith.constant 0 : i32
    return %arg0, %c0_i32, %arg1 : i32, i32, i32
  }
  func.func @transform_3(%arg0: i32, %arg1: i32) -> (i32, i32) {
    %c0_i32 = arith.constant 0 : i32
    %c0_i32_0 = arith.constant 0 : i32
    %c0_i32_1 = arith.constant 0 : i32
    return %c0_i32, %c0_i32_0 : i32, i32
  }
  func.func @transform_4(%arg0: i32, %arg1: i32) -> (i32, i32) {
    %c0_i32 = arith.constant 0 : i32
    %c0_i32_0 = arith.constant 0 : i32
    %c0_i32_1 = arith.constant 0 : i32
    return %c0_i32, %c0_i32_0 : i32, i32
  }
  func.func @transform_5(%arg0: i32, %arg1: i32) -> (i32, i32, i32) {
    %c0_i32 = arith.constant 0 : i32
    %c0_i32_0 = arith.constant 0 : i32
    return %arg0, %c0_i32, %arg1 : i32, i32, i32
  }
}

</mosaic_0001>

<llo_original>
// kernel: tpu_custom_call.1
$region0: #{tpu_custom_call.1}
  #allocation0 [shape = 'u32[]', space=smem, size = 0x4, offset = 0x4, fixed_abs, tag = 'smem constant byte address 0x4 - core index']
  #allocation1 [shape = 'u32[144,128]{1,0:T(1,128)}', space=vmem, size = 0x12000, scoped, tag = 'internal scratch']
  %s0 = inlined_call_operand.hbm [shape: f32[2,2,256], index: 0, kind: input, shape index: {}]
  %s1 = inlined_call_operand.hbm [shape: bf16[2,8,256], index: 1, kind: input, shape index: {}]
  %s2 = inlined_call_operand.vmem [shape: bf16[2,8,256], index: 2, kind: input, shape index: {}]
  %s3 = inlined_call_operand.vmem [shape: bf16[8,8], index: 3, kind: input, shape index: {}]
  %s4 = inlined_call_operand.vmem [shape: f32[8,1], index: 4, kind: input, shape index: {}]
  %s5 = inlined_call_operand.hbm [shape: f32[2,8,256], index: 5, kind: output, shape index: {}]
  %s6 = sld [smem:[#allocation0]]
  $region61: #{tpu_custom_call.1} parent=0
    _
  %s8 = ssub.s32 1, %s6
  %s9 = scalar_select 0, %s8, %s6
  $region1: #{tpu_custom_call.1} parent=0
    #allocation2 [shape = 'u8[4096]{0}', space=vmem, size = 0x1000, scoped, tag = 'input window, operand 0']
    #allocation3 [shape = 's32[2]{0}', space=sflag, size = 0x8, scoped, tag = 'scoped memory for tpu_custom_call.1']
    #allocation4 [shape = 's32[2]{0}', space=sflag, size = 0x8, scoped, tag = 'scoped memory for tpu_custom_call.1']
    #allocation5 [shape = 'u8[8192]{0}', space=vmem, size = 0x2000, scoped, tag = 'input window, operand 1']
    #allocation6 [shape = 's32[2]{0}', space=sflag, size = 0x8, scoped, tag = 'scoped memory for tpu_custom_call.1']
    #allocation7 [shape = 'u8[16384]{0}', space=vmem, size = 0x4000, scoped, tag = 'output window, operand 0']
    %10 = vsyncpa [#allocation3], 0
    %s11 = scalar_lea.sflag [#allocation3], 1
    %12 = vsyncpa %s11, 0
    %13 = vsyncpa [#allocation6], 0
    %s14 = scalar_lea.sflag [#allocation6], 1
    %15 = vsyncpa %s14, 0
    %16 = vsyncpa [#allocation4], 0
    %s17 = scalar_lea.sflag [#allocation4], 1
    %18 = vsyncpa %s17, 0
    loop: start=0, step=1, limit=4
    $region2: #{tpu_custom_call.1} parent=1 // loop_pre_header
      _
    $region3: #{tpu_custom_call.1} parent=1 // loop_header
      %s20 = sphi 0, %s24
      %p21 = scmp.ge.s32.totalorder %s20, 4
      %s27 = sphi 0, %s39
      %s28 = sphi 0, %s35
      %s29 = sphi 0, %s27
      %s30 = sphi 0, %s28
      %s31 = sphi 0, %s29
      %s32 = sphi 0, %s30
      %s44 = sphi 0, %s46
      %s47 = sphi 0, %s44
      %s48 = sphi 0, %s47
      %s64 = sphi 0, %s48
      %s70 = sphi 0, %s72
      %s73 = sphi 0, %s70
      %s74 = sphi 0, %s73
      %s90 = sphi 0, %s74
      %s98 = sphi 0, %s100
      %s101 = sphi 0, %s98
      %s102 = sphi 0, %s101
      %s118 = sphi 0, %s102
      %s122 = sphi 0, %s122
      %s124 = sphi 0, %s122
      %s125 = sphi 0, %s124
      %s139 = sphi 0, %s125
      %s143 = sphi 0, %s143
      %s145 = sphi 0, %s143
      %s146 = sphi 0, %s145
      %s160 = sphi 0, %s146
      %s168 = sphi 0, %s170
      %s171 = sphi 0, %s168
      %s172 = sphi 0, %s171
      %s188 = sphi 0, %s172
    $region4: #{tpu_custom_call.1} parent=1 // loop_header_branch
      %23 = sbr.rel (%p21) target = $region8
    $region5: #{tpu_custom_call.1} parent=1 // loop_body
      %s25 = ssub.s32 %s20, 1
      %s26 = ssub.s32 %s20, 2
      %s33 = sadd.s32 1, %s28
      %p34 = scmp.ge.s32.totalorder %s33, 1
      %s35 = scalar_select %p34, 0, %s33
      %s36 = sadd.s32 1, %s27
      %s37 = scalar_select %p34, %s36, %s27
      %p38 = scmp.ge.s32.totalorder %s37, 2
      %s39 = scalar_select %p38, 0, %s37
      %s40 = ssub.s32 %s27, %s39
      %s41 = ssub.s32 %s28, %s35
      %s42 = sor.u32 %s40, %s41
      %p43 = scmp.eq.s32.totalorder %s42, 0
      %s45 = sadd.s32 %s44, 1
      %s46 = scalar_select %p43, %s44, %s45
      %p49 = pneg %p43
      %p50 = scmp.eq.s32.totalorder %s20, 1
      %p51 = por %p49, %p50
      %p52 = scmp.ne.s32.totalorder %s44, %s47
      %p53 = scmp.eq.s32.totalorder %s20, 0
      %p54 = por %p52, %p53
      %p55 = scmp.ne.s32.totalorder %s44, %s47
      %p56 = scmp.eq.s32.totalorder %s25, 1
      %p57 = por %p55, %p56
      %p58 = scmp.ne.s32.totalorder %s47, %s48
      %p59 = scmp.eq.s32.totalorder %s25, 0
      %p60 = por %p58, %p59
      %p61 = scmp.ne.s32.totalorder %s47, %s48
      %p62 = scmp.eq.s32.totalorder %s26, 1
      %p63 = por %p61, %p62
      %p65 = scmp.ne.s32.totalorder %s48, %s64
      %p66 = scmp.eq.s32.totalorder %s26, 0
      %p67 = por %p65, %p66
      %s68 = ssub.s32 %s27, %s39
      %p69 = scmp.eq.s32.totalorder %s68, 0
      %s71 = sadd.s32 %s70, 1
      %s72 = scalar_select %p69, %s70, %s71
      %p75 = pneg %p69
      %p76 = scmp.eq.s32.totalorder %s20, 1
      %p77 = por %p75, %p76
      %p78 = scmp.ne.s32.totalorder %s70, %s73
      %p79 = scmp.eq.s32.totalorder %s20, 0
      %p80 = por %p78, %p79
      %p81 = scmp.ne.s32.totalorder %s70, %s73
      %p82 = scmp.eq.s32.totalorder %s25, 1
      %p83 = por %p81, %p82
      %p84 = scmp.ne.s32.totalorder %s73, %s74
      %p85 = scmp.eq.s32.totalorder %s25, 0
      %p86 = por %p84, %p85
      %p87 = scmp.ne.s32.totalorder %s73, %s74
      %p88 = scmp.eq.s32.totalorder %s26, 1
      %p89 = por %p87, %p88
      %p91 = scmp.ne.s32.totalorder %s74, %s90
      %p92 = scmp.eq.s32.totalorder %s26, 0
      %p93 = por %p91, %p92
      %s94 = ssub.s32 %s27, %s39
      %s95 = ssub.s32 %s28, %s35
      %s96 = sor.u32 %s94, %s95
      %p97 = scmp.eq.s32.totalorder %s96, 0
      %s99 = sadd.s32 %s98, 1
      %s100 = scalar_select %p97, %s98, %s99
      %p103 = pneg %p97
      %p104 = scmp.eq.s32.totalorder %s20, 1
      %p105 = por %p103, %p104
      %p106 = scmp.ne.s32.totalorder %s98, %s101
      %p107 = scmp.eq.s32.totalorder %s20, 0
      %p108 = por %p106, %p107
      %p109 = scmp.ne.s32.totalorder %s98, %s101
      %p110 = scmp.eq.s32.totalorder %s25, 1
      %p111 = por %p109, %p110
      %p112 = scmp.ne.s32.totalorder %s101, %s102
      %p113 = scmp.eq.s32.totalorder %s25, 0
      %p114 = por %p112, %p113
      %p115 = scmp.ne.s32.totalorder %s101, %s102
      %p116 = scmp.eq.s32.totalorder %s26, 1
      %p117 = por %p115, %p116
      %p119 = scmp.ne.s32.totalorder %s102, %s118
      %p120 = scmp.eq.s32.totalorder %s26, 0
      %p121 = por %p119, %p120
      %s123 = sadd.s32 %s122, 1
      %p126 = scmp.eq.s32.totalorder %s20, 1
      %p127 = scmp.ne.s32.totalorder %s122, %s124
      %p128 = scmp.eq.s32.totalorder %s20, 0
      %p129 = por %p127, %p128
      %p130 = scmp.ne.s32.totalorder %s122, %s124
      %p131 = scmp.eq.s32.totalorder %s25, 1
      %p132 = por %p130, %p131
      %p133 = scmp.ne.s32.totalorder %s124, %s125
      %p134 = scmp.eq.s32.totalorder %s25, 0
      %p135 = por %p133, %p134
      %p136 = scmp.ne.s32.totalorder %s124, %s125
      %p137 = scmp.eq.s32.totalorder %s26, 1
      %p138 = por %p136, %p137
      %p140 = scmp.ne.s32.totalorder %s125, %s139
      %p141 = scmp.eq.s32.totalorder %s26, 0
      %p142 = por %p140, %p141
      %s144 = sadd.s32 %s143, 1
      %p147 = scmp.eq.s32.totalorder %s20, 1
      %p148 = scmp.ne.s32.totalorder %s143, %s145
      %p149 = scmp.eq.s32.totalorder %s20, 0
      %p150 = por %p148, %p149
      %p151 = scmp.ne.s32.totalorder %s143, %s145
      %p152 = scmp.eq.s32.totalorder %s25, 1
      %p153 = por %p151, %p152
      %p154 = scmp.ne.s32.totalorder %s145, %s146
      %p155 = scmp.eq.s32.totalorder %s25, 0
      %p156 = por %p154, %p155
      %p157 = scmp.ne.s32.totalorder %s145, %s146
      %p158 = scmp.eq.s32.totalorder %s26, 1
      %p159 = por %p157, %p158
      %p161 = scmp.ne.s32.totalorder %s146, %s160
      %p162 = scmp.eq.s32.totalorder %s26, 0
      %p163 = por %p161, %p162
      %s164 = ssub.s32 %s27, %s39
      %s165 = ssub.s32 %s28, %s35
      %s166 = sor.u32 %s164, %s165
      %p167 = scmp.eq.s32.totalorder %s166, 0
      %s169 = sadd.s32 %s168, 1
      %s170 = scalar_select %p167, %s168, %s169
      %p173 = pneg %p167
      %p174 = scmp.eq.s32.totalorder %s20, 1
      %p175 = por %p173, %p174
      %p176 = scmp.ne.s32.totalorder %s168, %s171
      %p177 = scmp.eq.s32.totalorder %s20, 0
      %p178 = por %p176, %p177
      %p179 = scmp.ne.s32.totalorder %s168, %s171
      %p180 = scmp.eq.s32.totalorder %s25, 1
      %p181 = por %p179, %p180
      %p182 = scmp.ne.s32.totalorder %s171, %s172
      %p183 = scmp.eq.s32.totalorder %s25, 0
      %p184 = por %p182, %p183
      %p185 = scmp.ne.s32.totalorder %s171, %s172
      %p186 = scmp.eq.s32.totalorder %s26, 1
      %p187 = por %p185, %p186
      %p189 = scmp.ne.s32.totalorder %s172, %s188
      %p190 = scmp.eq.s32.totalorder %s26, 0
      %p191 = por %p189, %p190
      %p192 = scmp.le.s32.totalorder 1, %s20
      %p193 = scmp.lt.s32.totalorder %s20, 3
      %p194 = pnand %p192, %p193
      %p195 = pneg %p194
      // Predicated region
      $region9: #{tpu_custom_call.1} parent=5 // pred_check
        _
      $region10: #{tpu_custom_call.1} parent=5 // pred_check_branch
        %197 = sbr.rel (%p194) target = $region12
      $region11: #{tpu_custom_call.1} parent=5 // pred_region
        %s198 = ssub.s32 %s20, 1
        // Predicated region
        $region13: #{tpu_custom_call.1} parent=11 // pred_check
          %p199 = pneg %p135
        $region14: #{tpu_custom_call.1} parent=11 // pred_check_branch
          %201 = sbr.rel (%p199) target = $region16
        $region15: #{tpu_custom_call.1} parent=11 // pred_region
          _
        $region16: #{tpu_custom_call.1} parent=11 // pred_fallthru
          _
        // Predicated region
        $region17: #{tpu_custom_call.1} parent=11 // pred_check
          %p202 = pneg %p156
        $region18: #{tpu_custom_call.1} parent=11 // pred_check_branch
          %204 = sbr.rel (%p202) target = $region20
        $region19: #{tpu_custom_call.1} parent=11 // pred_region
          _
        $region20: #{tpu_custom_call.1} parent=11 // pred_fallthru
          _
      $region12: #{tpu_custom_call.1} parent=5 // pred_fallthru
        _
      %p205 = scmp.lt.s32.totalorder %s20, 2
      // Predicated region
      $region21: #{tpu_custom_call.1} parent=5 // pred_check
        %p206 = pneg %p205
      $region22: #{tpu_custom_call.1} parent=5 // pred_check_branch
        %208 = sbr.rel (%p206) target = $region24
      $region23: #{tpu_custom_call.1} parent=5 // pred_region
        // Predicated region
        $region25: #{tpu_custom_call.1} parent=23 // pred_check
          %p209 = pneg %p54
        $region26: #{tpu_custom_call.1} parent=23 // pred_check_branch
          %211 = sbr.rel (%p209) target = $region28
        $region27: #{tpu_custom_call.1} parent=23 // pred_region
          %s212 = sand.u32 %s44, 1
          %s213 = scalar_lea.sflag [#allocation3], %s212
          %s214 = sand.u32 %s44, 1
          %s215 = smul.addr %s214, 4
          %s216 = scalar_lea.vmem [#allocation2], %s215
          %s217 = smul.u32 2, %s28
          %s219 = ssub.s32 64, 64
          %220 = vsyncadd %s213, %s219
          %s221 = smul.addr %s27, 2
          %s222 = sadd.s32 %s217, %s221
          %s223 = smul.addr %s222, 32
          %s224 = scalar_lea.hbm %s0, %s223
          %s226 = sshll.u32 %s216, 4
          %s227 = int_to_ptr.vmem [resolvable:$true] %s226
          %229 = dma.hbm_to_vmem [thread:$0]  %s224, 64, %s227, %s213
        $region28: #{tpu_custom_call.1} parent=23 // pred_fallthru
          _
        // Predicated region
        $region29: #{tpu_custom_call.1} parent=23 // pred_check
          %p230 = pneg %p80
        $region30: #{tpu_custom_call.1} parent=23 // pred_check_branch
          %232 = sbr.rel (%p230) target = $region32
        $region31: #{tpu_custom_call.1} parent=23 // pred_region
          %s233 = sand.u32 %s70, 1
          %s234 = scalar_lea.sflag [#allocation6], %s233
          %s235 = sand.u32 %s70, 1
          %s236 = smul.addr %s235, 8
          %s237 = scalar_lea.vmem [#allocation5], %s236
          %s239 = ssub.s32 128, 128
          %240 = vsyncadd %s234, %s239
          %s241 = smul.addr %s27, 2
          %s242 = smul.addr %s241, 64
          %s243 = scalar_lea.hbm %s1, %s242
          %s245 = sshll.u32 %s237, 4
          %s246 = int_to_ptr.vmem [resolvable:$true] %s245
          %248 = dma.hbm_to_vmem [thread:$0]  %s243, 128, %s246, %s234
        $region32: #{tpu_custom_call.1} parent=23 // pred_fallthru
          _
        // Predicated region
        $region33: #{tpu_custom_call.1} parent=23 // pred_check
          %p249 = pneg %p108
        $region34: #{tpu_custom_call.1} parent=23 // pred_check_branch
          %251 = sbr.rel (%p249) target = $region36
        $region35: #{tpu_custom_call.1} parent=23 // pred_region
          %s252 = smul.u32 2, %s28
          %p253 = scmp.lt.s32.totalorder %s27, 1
          %s254 = scalar_select %p253, %s27, 1
          %p255 = scmp.lt.s32.totalorder %s252, 1
          %s256 = scalar_select %p255, %s252, 1
          %s257 = smul.addr %s254, 2
          %s258 = sadd.s32 %s256, %s257
          %s259 = smul.addr %s258, 4
          %s260 = scalar_lea.vmem %s2, %s259
          %s261 = smul.u32 2, %s28
        $region36: #{tpu_custom_call.1} parent=23 // pred_fallthru
          _
      $region24: #{tpu_custom_call.1} parent=5 // pred_fallthru
        _
      %p262 = scmp.le.s32.totalorder 1, %s20
      %p263 = scmp.lt.s32.totalorder %s20, 3
      %p264 = pnand %p262, %p263
      %p265 = pneg %p264
      // Predicated region
      $region37: #{tpu_custom_call.1} parent=5 // pred_check
        _
      $region38: #{tpu_custom_call.1} parent=5 // pred_check_branch
        %267 = sbr.rel (%p264) target = $region40
      $region39: #{tpu_custom_call.1} parent=5 // pred_region
        %s268 = ssub.s32 %s20, 1
        %s269 = sand.u32 %s47, 1
        %s270 = scalar_lea.sflag [#allocation3], %s269
        %s271 = sand.u32 %s47, 1
        %s272 = smul.addr %s271, 4
        %s273 = scalar_lea.vmem [#allocation2], %s272
        // Predicated region
        $region41: #{tpu_custom_call.1} parent=39 // pred_check
          %p274 = pneg %p60
        $region42: #{tpu_custom_call.1} parent=39 // pred_check_branch
          %276 = sbr.rel (%p274) target = $region44
        $region43: #{tpu_custom_call.1} parent=39 // pred_region
          %277 = dma.done %s270, 64
        $region44: #{tpu_custom_call.1} parent=39 // pred_fallthru
          _
        %s278 = sand.u32 %s73, 1
        %s279 = scalar_lea.sflag [#allocation6], %s278
        %s280 = sand.u32 %s73, 1
        %s281 = smul.addr %s280, 8
        %s282 = scalar_lea.vmem [#allocation5], %s281
        // Predicated region
        $region45: #{tpu_custom_call.1} parent=39 // pred_check
          %p283 = pneg %p86
        $region46: #{tpu_custom_call.1} parent=39 // pred_check_branch
          %285 = sbr.rel (%p283) target = $region48
        $region47: #{tpu_custom_call.1} parent=39 // pred_region
          %286 = dma.done %s279, 128
        $region48: #{tpu_custom_call.1} parent=39 // pred_fallthru
          _
        %s287 = sand.u32 %s47, 1
        %s288 = scalar_lea.sflag [#allocation3], %s287
        %s289 = sand.u32 %s47, 1
        %s290 = smul.addr %s289, 4
        %s291 = scalar_lea.vmem [#allocation2], %s290
        %p292 = pneg %p60
        %p293 = pneg %p57
        %s294 = sand.u32 %s73, 1
        %s295 = scalar_lea.sflag [#allocation6], %s294
        %s296 = sand.u32 %s73, 1
        %s297 = smul.addr %s296, 8
        %s298 = scalar_lea.vmem [#allocation5], %s297
        %p299 = pneg %p86
        %p300 = pneg %p83
        %s301 = smul.u32 2, %s30
        %p302 = scmp.lt.s32.totalorder %s29, 1
        %s303 = scalar_select %p302, %s29, 1
        %p304 = scmp.lt.s32.totalorder %s301, 1
        %s305 = scalar_select %p304, %s301, 1
        %s306 = smul.addr %s303, 2
        %s307 = sadd.s32 %s305, %s306
        %s308 = smul.addr %s307, 4
        %s309 = scalar_lea.vmem %s2, %s308
        %p310 = pneg %p114
        %p311 = pneg %p111
        %p312 = pneg %p135
        %p313 = pneg %p132
        %p314 = pneg %p156
        %p315 = pneg %p153
        %p316 = pneg %p184
        %p317 = pneg %p181
        %s318 = sand.u32 %s171, 1
        %s319 = scalar_lea.sflag [#allocation4], %s318
        %s320 = sand.u32 %s171, 1
        %s321 = smul.addr %s320, 16
        %s322 = scalar_lea.vmem [#allocation7], %s321
        %s323 = smul.u32 2, %s30
        %s324 = smul.u32 2, %s30
        %p325 = scmp.lt.s32.totalorder %s29, 1
        %s326 = scalar_select %p325, %s29, 1
        %p327 = scmp.lt.s32.totalorder %s324, 1
        %s328 = scalar_select %p327, %s324, 1
        %s329 = smul.addr %s326, 2
        %s330 = sadd.s32 %s328, %s329
        %s331 = smul.addr %s330, 4
        %s332 = scalar_lea.vmem %s2, %s331
        %s333 = smul.u32 2, %s30
        %s334 = smul.u32 2, %s30
        %v336 = vld [vmem:[%s273] ss:$2 sm:$0x3]
        %s337 = scalar_lea.vmem %s273, 1 [#allocation2]
        %v338 = vld [vmem:[%s337] ss:$2 sm:$0x3]
        %v339 = vfloor.f32 %v336
        %v340 = vfloor.f32 %v338
        %v341 = vcvt.f32.s32.to.zero.pseudo %v339
        %v342 = vcvt.f32.s32.to.zero.pseudo %v340
        %v343 = vsub.f32 %v336, %v339
        %v344 = vsub.f32 %v338, %v340
        %v345 = vlaneseq
        %v346 = vshrl.u32 %v345, 7
        %v347 = vadd.s32 %v346, 8
        %v348 = vlaneseq
        %v349 = vshrl.u32 %v348, 7
        %v350 = vsub.s32 0, %v349
        %v351 = vrot.slane %v342, %v350
        %v352 = vlaneseq
        %v353 = vshrl.u32 %v352, 7
        %v354 = vsub.s32 1, %v353
        %v355 = vrot.slane %v342, %v354
        %vm356 = vcmp.eq.s32.totalorder %v346, %v351
        %vm357 = vcmp.eq.s32.totalorder %v346, %v355
        %vm358 = vcmp.eq.s32.totalorder %v347, %v351
        %vm359 = vcmp.eq.s32.totalorder %v347, %v355
        %v360 = vsub.f32 1.0, %v344
        %v362 = vlaneseq
        %v363 = vshrl.u32 %v362, 7
        %v364 = vsub.s32 0, %v363
        %v365 = vrot.slane %v360, %v364
        %v366 = vlaneseq
        %v367 = vshrl.u32 %v366, 7
        %v368 = vsub.s32 1, %v367
        %v369 = vrot.slane %v360, %v368
        %v372 = vsel %vm356, %v365, 0.0
        %v373 = vsel %vm357, %v369, 0.0
        %v374 = vsel %vm358, %v365, 0.0
        %v375 = vsel %vm359, %v369, 0.0
        %v376 = vadd.s32 %v342, 1
        %v377 = vlaneseq
        %v378 = vshrl.u32 %v377, 7
        %v379 = vsub.s32 0, %v378
        %v380 = vrot.slane %v376, %v379
        %v381 = vlaneseq
        %v382 = vshrl.u32 %v381, 7
        %v383 = vsub.s32 1, %v382
        %v384 = vrot.slane %v376, %v383
        %vm385 = vcmp.eq.s32.totalorder %v346, %v380
        %vm386 = vcmp.eq.s32.totalorder %v346, %v384
        %vm387 = vcmp.eq.s32.totalorder %v347, %v380
        %vm388 = vcmp.eq.s32.totalorder %v347, %v384
        %v390 = vlaneseq
        %v391 = vshrl.u32 %v390, 7
        %v392 = vsub.s32 0, %v391
        %v393 = vrot.slane %v344, %v392
        %v394 = vlaneseq
        %v395 = vshrl.u32 %v394, 7
        %v396 = vsub.s32 1, %v395
        %v397 = vrot.slane %v344, %v396
        %v400 = vsel %vm385, %v393, 0.0
        %v401 = vsel %vm386, %v397, 0.0
        %v402 = vsel %vm387, %v393, 0.0
        %v403 = vsel %vm388, %v397, 0.0
        %v404 = vadd.f32 %v372, %v400
        %v405 = vadd.f32 %v373, %v401
        %v406 = vadd.f32 %v374, %v402
        %v407 = vadd.f32 %v375, %v403
        %v408 = vlaneseq
        %v409 = vshrl.u32 %v408, 7
        %v410 = vsub.s32 0, %v409
        %v411 = vrot.slane %v341, %v410
        %v412 = vlaneseq
        %v413 = vshrl.u32 %v412, 7
        %v414 = vsub.s32 1, %v413
        %v415 = vrot.slane %v341, %v414
        %vm416 = vcmp.eq.s32.totalorder %v346, %v411
        %vm417 = vcmp.eq.s32.totalorder %v346, %v415
        %vm418 = vcmp.eq.s32.totalorder %v347, %v411
        %vm419 = vcmp.eq.s32.totalorder %v347, %v415
        %v420 = vsub.f32 1.0, %v343
        %v422 = vlaneseq
        %v423 = vshrl.u32 %v422, 7
        %v424 = vsub.s32 0, %v423
        %v425 = vrot.slane %v420, %v424
        %v426 = vlaneseq
        %v427 = vshrl.u32 %v426, 7
        %v428 = vsub.s32 1, %v427
        %v429 = vrot.slane %v420, %v428
        %v432 = vsel %vm416, %v425, 0.0
        %v433 = vsel %vm417, %v429, 0.0
        %v434 = vsel %vm418, %v425, 0.0
        %v435 = vsel %vm419, %v429, 0.0
        %v436 = vadd.s32 %v341, 1
        %v437 = vlaneseq
        %v438 = vshrl.u32 %v437, 7
        %v439 = vsub.s32 0, %v438
        %v440 = vrot.slane %v436, %v439
        %v441 = vlaneseq
        %v442 = vshrl.u32 %v441, 7
        %v443 = vsub.s32 1, %v442
        %v444 = vrot.slane %v436, %v443
        %vm445 = vcmp.eq.s32.totalorder %v346, %v440
        %vm446 = vcmp.eq.s32.totalorder %v346, %v444
        %vm447 = vcmp.eq.s32.totalorder %v347, %v440
        %vm448 = vcmp.eq.s32.totalorder %v347, %v444
        %v450 = vlaneseq
        %v451 = vshrl.u32 %v450, 7
        %v452 = vsub.s32 0, %v451
        %v453 = vrot.slane %v343, %v452
        %v454 = vlaneseq
        %v455 = vshrl.u32 %v454, 7
        %v456 = vsub.s32 1, %v455
        %v457 = vrot.slane %v343, %v456
        %v460 = vsel %vm445, %v453, 0.0
        %v461 = vsel %vm446, %v457, 0.0
        %v462 = vsel %vm447, %v453, 0.0
        %v463 = vsel %vm448, %v457, 0.0
        %v464 = vadd.f32 %v432, %v460
        %v465 = vadd.f32 %v433, %v461
        %v466 = vadd.f32 %v434, %v462
        %v467 = vadd.f32 %v435, %v463
        %v472 = vcombine.low %v404, %v405
        %v473 = vcombine.high %v404, %v405
        %v475 = vunpack.c.l.s4 1966171168
        %v476 = vunpack.c.0.s8 %v475
        %v477 = vlaneseq
        %v478 = vshrl.u32 %v477, 7
        %v479 = vsub.s32 %v476, %v478
        %v480 = vrot.slane %v472, %v479
        %v482 = vunpack.c.l.s4 1966171168
        %v483 = vunpack.c.0.s8 %v482
        %v484 = vlaneseq
        %v485 = vshrl.u32 %v484, 7
        %v486 = vsub.s32 %v483, %v485
        %v487 = vrot.slane %v473, %v486
        %v488 = vcombine.high %v480, %v480
        %v489 = vcombine.high %v487, %v487
        %v491 = vunpack.c.l.s4 1966171168
        %v492 = vunpack.c.0.s8 %v491
        %v493 = vlaneseq
        %v494 = vshrl.u32 %v493, 7
        %v495 = vsub.s32 %v492, %v494
        %v496 = vrot.slane %v480, %v495
        %v498 = vunpack.c.l.s4 1966171168
        %v499 = vunpack.c.0.s8 %v498
        %v500 = vlaneseq
        %v501 = vshrl.u32 %v500, 7
        %v502 = vsub.s32 %v499, %v501
        %v503 = vrot.slane %v487, %v502
        %v505 = vunpack.c.l.s4 1966171168
        %v506 = vunpack.c.0.s8 %v505
        %v507 = vlaneseq
        %v508 = vshrl.u32 %v507, 7
        %v509 = vsub.s32 %v506, %v508
        %v510 = vrot.slane %v488, %v509
        %v512 = vunpack.c.l.s4 1966171168
        %v513 = vunpack.c.0.s8 %v512
        %v514 = vlaneseq
        %v515 = vshrl.u32 %v514, 7
        %v516 = vsub.s32 %v513, %v515
        %v517 = vrot.slane %v489, %v516
        %v518 = vcombine.high %v496, %v496
        %v519 = vcombine.high %v503, %v503
        %v520 = vcombine.high %v510, %v510
        %v521 = vcombine.high %v517, %v517
        %v522 = vcombine.low %v406, %v407
        %v523 = vcombine.high %v406, %v407
        %v525 = vunpack.c.l.s4 1966171168
        %v526 = vunpack.c.0.s8 %v525
        %v527 = vlaneseq
        %v528 = vshrl.u32 %v527, 7
        %v529 = vsub.s32 %v526, %v528
        %v530 = vrot.slane %v522, %v529
        %v532 = vunpack.c.l.s4 1966171168
        %v533 = vunpack.c.0.s8 %v532
        %v534 = vlaneseq
        %v535 = vshrl.u32 %v534, 7
        %v536 = vsub.s32 %v533, %v535
        %v537 = vrot.slane %v523, %v536
        %v538 = vcombine.high %v530, %v530
        %v539 = vcombine.high %v537, %v537
        %v541 = vunpack.c.l.s4 1966171168
        %v542 = vunpack.c.0.s8 %v541
        %v543 = vlaneseq
        %v544 = vshrl.u32 %v543, 7
        %v545 = vsub.s32 %v542, %v544
        %v546 = vrot.slane %v530, %v545
        %v548 = vunpack.c.l.s4 1966171168
        %v549 = vunpack.c.0.s8 %v548
        %v550 = vlaneseq
        %v551 = vshrl.u32 %v550, 7
        %v552 = vsub.s32 %v549, %v551
        %v553 = vrot.slane %v537, %v552
        %v555 = vunpack.c.l.s4 1966171168
        %v556 = vunpack.c.0.s8 %v555
        %v557 = vlaneseq
        %v558 = vshrl.u32 %v557, 7
        %v559 = vsub.s32 %v556, %v558
        %v560 = vrot.slane %v538, %v559
        %v562 = vunpack.c.l.s4 1966171168
        %v563 = vunpack.c.0.s8 %v562
        %v564 = vlaneseq
        %v565 = vshrl.u32 %v564, 7
        %v566 = vsub.s32 %v563, %v565
        %v567 = vrot.slane %v539, %v566
        %v568 = vcombine.high %v546, %v546
        %v569 = vcombine.high %v553, %v553
        %v570 = vcombine.high %v560, %v560
        %v571 = vcombine.high %v567, %v567
        %v572 = vlaneseq
        %v573 = vshrl.u32 %v572, 7
        %v574 = vsub.s32 0, %v573
        %v575 = vrot.slane %v496, %v574
        %v576 = vlaneseq
        %v577 = vshrl.u32 %v576, 7
        %v578 = vsub.s32 1, %v577
        %v579 = vrot.slane %v496, %v578
        %v580 = vlaneseq
        %v581 = vshrl.u32 %v580, 7
        %v582 = vsub.s32 0, %v581
        %v583 = vrot.slane %v510, %v582
        %v584 = vlaneseq
        %v585 = vshrl.u32 %v584, 7
        %v586 = vsub.s32 1, %v585
        %v587 = vrot.slane %v510, %v586
        %v588 = vlaneseq
        %v589 = vshrl.u32 %v588, 7
        %v590 = vsub.s32 0, %v589
        %v591 = vrot.slane %v518, %v590
        %v592 = vlaneseq
        %v593 = vshrl.u32 %v592, 7
        %v594 = vsub.s32 1, %v593
        %v595 = vrot.slane %v518, %v594
        %v596 = vlaneseq
        %v597 = vshrl.u32 %v596, 7
        %v598 = vsub.s32 0, %v597
        %v599 = vrot.slane %v520, %v598
        %v600 = vlaneseq
        %v601 = vshrl.u32 %v600, 7
        %v602 = vsub.s32 1, %v601
        %v603 = vrot.slane %v520, %v602
        %v604 = vlaneseq
        %v605 = vshrl.u32 %v604, 7
        %v606 = vsub.s32 0, %v605
        %v607 = vrot.slane %v503, %v606
        %v608 = vlaneseq
        %v609 = vshrl.u32 %v608, 7
        %v610 = vsub.s32 1, %v609
        %v611 = vrot.slane %v503, %v610
        %v612 = vlaneseq
        %v613 = vshrl.u32 %v612, 7
        %v614 = vsub.s32 0, %v613
        %v615 = vrot.slane %v517, %v614
        %v616 = vlaneseq
        %v617 = vshrl.u32 %v616, 7
        %v618 = vsub.s32 1, %v617
        %v619 = vrot.slane %v517, %v618
        %v620 = vlaneseq
        %v621 = vshrl.u32 %v620, 7
        %v622 = vsub.s32 0, %v621
        %v623 = vrot.slane %v519, %v622
        %v624 = vlaneseq
        %v625 = vshrl.u32 %v624, 7
        %v626 = vsub.s32 1, %v625
        %v627 = vrot.slane %v519, %v626
        %v628 = vlaneseq
        %v629 = vshrl.u32 %v628, 7
        %v630 = vsub.s32 0, %v629
        %v631 = vrot.slane %v521, %v630
        %v632 = vlaneseq
        %v633 = vshrl.u32 %v632, 7
        %v634 = vsub.s32 1, %v633
        %v635 = vrot.slane %v521, %v634
        %v636 = vlaneseq
        %v637 = vshrl.u32 %v636, 7
        %v638 = vsub.s32 0, %v637
        %v639 = vrot.slane %v546, %v638
        %v640 = vlaneseq
        %v641 = vshrl.u32 %v640, 7
        %v642 = vsub.s32 1, %v641
        %v643 = vrot.slane %v546, %v642
        %v644 = vlaneseq
        %v645 = vshrl.u32 %v644, 7
        %v646 = vsub.s32 0, %v645
        %v647 = vrot.slane %v560, %v646
        %v648 = vlaneseq
        %v649 = vshrl.u32 %v648, 7
        %v650 = vsub.s32 1, %v649
        %v651 = vrot.slane %v560, %v650
        %v652 = vlaneseq
        %v653 = vshrl.u32 %v652, 7
        %v654 = vsub.s32 0, %v653
        %v655 = vrot.slane %v568, %v654
        %v656 = vlaneseq
        %v657 = vshrl.u32 %v656, 7
        %v658 = vsub.s32 1, %v657
        %v659 = vrot.slane %v568, %v658
        %v660 = vlaneseq
        %v661 = vshrl.u32 %v660, 7
        %v662 = vsub.s32 0, %v661
        %v663 = vrot.slane %v570, %v662
        %v664 = vlaneseq
        %v665 = vshrl.u32 %v664, 7
        %v666 = vsub.s32 1, %v665
        %v667 = vrot.slane %v570, %v666
        %v668 = vlaneseq
        %v669 = vshrl.u32 %v668, 7
        %v670 = vsub.s32 0, %v669
        %v671 = vrot.slane %v553, %v670
        %v672 = vlaneseq
        %v673 = vshrl.u32 %v672, 7
        %v674 = vsub.s32 1, %v673
        %v675 = vrot.slane %v553, %v674
        %v676 = vlaneseq
        %v677 = vshrl.u32 %v676, 7
        %v678 = vsub.s32 0, %v677
        %v679 = vrot.slane %v567, %v678
        %v680 = vlaneseq
        %v681 = vshrl.u32 %v680, 7
        %v682 = vsub.s32 1, %v681
        %v683 = vrot.slane %v567, %v682
        %v684 = vlaneseq
        %v685 = vshrl.u32 %v684, 7
        %v686 = vsub.s32 0, %v685
        %v687 = vrot.slane %v569, %v686
        %v688 = vlaneseq
        %v689 = vshrl.u32 %v688, 7
        %v690 = vsub.s32 1, %v689
        %v691 = vrot.slane %v569, %v690
        %v692 = vlaneseq
        %v693 = vshrl.u32 %v692, 7
        %v694 = vsub.s32 0, %v693
        %v695 = vrot.slane %v571, %v694
        %v696 = vlaneseq
        %v697 = vshrl.u32 %v696, 7
        %v698 = vsub.s32 1, %v697
        %v699 = vrot.slane %v571, %v698
        %v732 = vmul.f32 %v575, %v464
        %v733 = vmul.f32 %v579, %v465
        %v734 = vmul.f32 %v575, %v466
        %v735 = vmul.f32 %v579, %v467
        %v736 = vmul.f32 %v583, %v464
        %v737 = vmul.f32 %v587, %v465
        %v738 = vmul.f32 %v583, %v466
        %v739 = vmul.f32 %v587, %v467
        %v740 = vmul.f32 %v591, %v464
        %v741 = vmul.f32 %v595, %v465
        %v742 = vmul.f32 %v591, %v466
        %v743 = vmul.f32 %v595, %v467
        %v744 = vmul.f32 %v599, %v464
        %v745 = vmul.f32 %v603, %v465
        %v746 = vmul.f32 %v599, %v466
        %v747 = vmul.f32 %v603, %v467
        %v748 = vmul.f32 %v607, %v464
        %v749 = vmul.f32 %v611, %v465
        %v750 = vmul.f32 %v607, %v466
        %v751 = vmul.f32 %v611, %v467
        %v752 = vmul.f32 %v615, %v464
        %v753 = vmul.f32 %v619, %v465
        %v754 = vmul.f32 %v615, %v466
        %v755 = vmul.f32 %v619, %v467
        %v756 = vmul.f32 %v623, %v464
        %v757 = vmul.f32 %v627, %v465
        %v758 = vmul.f32 %v623, %v466
        %v759 = vmul.f32 %v627, %v467
        %v760 = vmul.f32 %v631, %v464
        %v761 = vmul.f32 %v635, %v465
        %v762 = vmul.f32 %v631, %v466
        %v763 = vmul.f32 %v635, %v467
        %v764 = vmul.f32 %v639, %v464
        %v765 = vmul.f32 %v643, %v465
        %v766 = vmul.f32 %v639, %v466
        %v767 = vmul.f32 %v643, %v467
        %v768 = vmul.f32 %v647, %v464
        %v769 = vmul.f32 %v651, %v465
        %v770 = vmul.f32 %v647, %v466
        %v771 = vmul.f32 %v651, %v467
        %v772 = vmul.f32 %v655, %v464
        %v773 = vmul.f32 %v659, %v465
        %v774 = vmul.f32 %v655, %v466
        %v775 = vmul.f32 %v659, %v467
        %v776 = vmul.f32 %v663, %v464
        %v777 = vmul.f32 %v667, %v465
        %v778 = vmul.f32 %v663, %v466
        %v779 = vmul.f32 %v667, %v467
        %v780 = vmul.f32 %v671, %v464
        %v781 = vmul.f32 %v675, %v465
        %v782 = vmul.f32 %v671, %v466
        %v783 = vmul.f32 %v675, %v467
        %v784 = vmul.f32 %v679, %v464
        %v785 = vmul.f32 %v683, %v465
        %v786 = vmul.f32 %v679, %v466
        %v787 = vmul.f32 %v683, %v467
        %v788 = vmul.f32 %v687, %v464
        %v789 = vmul.f32 %v691, %v465
        %v790 = vmul.f32 %v687, %v466
        %v791 = vmul.f32 %v691, %v467
        %v792 = vmul.f32 %v695, %v464
        %v793 = vmul.f32 %v699, %v465
        %v794 = vmul.f32 %v695, %v466
        %v795 = vmul.f32 %v699, %v467
        %v796 = vpack.c.bf16 %v734, %v732
        %v797 = vpack.c.bf16 %v735, %v733
        %v798 = vpack.c.bf16 %v738, %v736
        %v799 = vpack.c.bf16 %v739, %v737
        %v800 = vpack.c.bf16 %v742, %v740
        %v801 = vpack.c.bf16 %v743, %v741
        %v802 = vpack.c.bf16 %v746, %v744
        %v803 = vpack.c.bf16 %v747, %v745
        %v804 = vpack.c.bf16 %v750, %v748
        %v805 = vpack.c.bf16 %v751, %v749
        %v806 = vpack.c.bf16 %v754, %v752
        %v807 = vpack.c.bf16 %v755, %v753
        %v808 = vpack.c.bf16 %v758, %v756
        %v809 = vpack.c.bf16 %v759, %v757
        %v810 = vpack.c.bf16 %v762, %v760
        %v811 = vpack.c.bf16 %v763, %v761
        %v812 = vpack.c.bf16 %v766, %v764
        %v813 = vpack.c.bf16 %v767, %v765
        %v814 = vpack.c.bf16 %v770, %v768
        %v815 = vpack.c.bf16 %v771, %v769
        %v816 = vpack.c.bf16 %v774, %v772
        %v817 = vpack.c.bf16 %v775, %v773
        %v818 = vpack.c.bf16 %v778, %v776
        %v819 = vpack.c.bf16 %v779, %v777
        %v820 = vpack.c.bf16 %v782, %v780
        %v821 = vpack.c.bf16 %v783, %v781
        %v822 = vpack.c.bf16 %v786, %v784
        %v823 = vpack.c.bf16 %v787, %v785
        %v824 = vpack.c.bf16 %v790, %v788
        %v825 = vpack.c.bf16 %v791, %v789
        %v826 = vpack.c.bf16 %v794, %v792
        %v827 = vpack.c.bf16 %v795, %v793
        %v828 = vld [vmem:[%s282] sm:$0xff]
        %v829 = vld [vmem:[%s3] sm:$0xf]
        %v830 = vld [vmem:[%s332] sm:$0xff]
        %v832 = vunpack.c.l.b16 %v830
        %v833 = vunpack.c.h.b16 %v830
        %v834 = vpack.c.b16 %v832, %v832
        %v835 = vpack.c.b16 %v833, %v833
        %vm836 = vcmask 64512
        %v838 = vsel %vm836, %v829, 0
        %vm840 = vcmask 1043456
        %v842 = vsel %vm840, %v834, 0
        %v845 = vsel %vm840, %v835, 0
        %847 = vmatprep.subr.bf16.mxu0 %v845
        %848 = vmatpush1.bf16.msra.mxu0 %v842
        %849 = vmatprep.subr.bf16.mxu0 0
        %850 = vmatpush1.bf16.msra.mxu0 0
        %851 = vmatprep.subr.bf16.mxu0 0
        %852 = vmatpush1.bf16.msra.mxu0 0
        %853 = vmatprep.subr.bf16.mxu0 0
        %854 = vmatpush1.bf16.msra.mxu0 0
        %855 = vmatprep.subr.bf16.mxu0 0
        %856 = vmatpush1.bf16.msra.mxu0 0
        %857 = vmatprep.subr.bf16.mxu0 0
        %858 = vmatpush1.bf16.msra.mxu0 0
        %859 = vmatprep.subr.bf16.mxu0 0
        %860 = vmatpush1.bf16.msra.mxu0 0
        %861 = vmatprep.subr.bf16.mxu0 0
        %862 = vmatpush1.bf16.msra.mxu0 0
        %863 = vmatprep.subr.bf16.mxu0 0
        %864 = vmatpush1.bf16.msra.mxu0 0
        %865 = vmatprep.subr.bf16.mxu0 0
        %866 = vmatpush1.bf16.msra.mxu0 0
        %867 = vmatprep.subr.bf16.mxu0 0
        %868 = vmatpush1.bf16.msra.mxu0 0
        %869 = vmatprep.subr.bf16.mxu0 0
        %870 = vmatpush1.bf16.msra.mxu0 0
        %871 = vmatprep.subr.bf16.mxu0 0
        %872 = vmatpush1.bf16.msra.mxu0 0
        %873 = vmatprep.subr.bf16.mxu0 0
        %874 = vmatpush1.bf16.msra.mxu0 0
        %875 = vmatprep.subr.bf16.mxu0 0
        %876 = vmatpush1.bf16.msra.mxu0 0
        %877 = vmatprep.subr.bf16.mxu0 0
        %878 = vmatpush1.bf16.msra.mxu0 0
        %879 = vmatprep.mubr.bf16.mxu0 0
        %880 = vmatmul.mubr.bf16.gmra.mrb[0].mxu0 %v838
        %v881 = vpop.f32.mrb[0].mxu0
        %v882 = vadd.f32 0.0, %v881
        %v883 = vpop.f32.mrb[0].mxu0
        %v884 = vadd.f32 0.0, %v883
        %v885 = vpop.f32.mrb[0].mxu0
        %v886 = vpop.f32.mrb[0].mxu0
        %887 = vdwg.mxu0
        %v889 = vunpack.c.l.b16 %v828
        %v890 = vunpack.c.h.b16 %v828
        %v891 = vpack.c.b16 %v889, %v889
        %v892 = vpack.c.b16 %v890, %v890
        %895 = vmatprep.subr.bf16.mxu0 %v797
        %896 = vmatpush1.bf16.msra.mxu0 %v796
        %897 = vmatprep.subr.bf16.mxu0 %v799
        %898 = vmatpush1.bf16.msra.mxu0 %v798
        %899 = vmatprep.subr.bf16.mxu0 %v801
        %900 = vmatpush1.bf16.msra.mxu0 %v800
        %901 = vmatprep.subr.bf16.mxu0 %v803
        %902 = vmatpush1.bf16.msra.mxu0 %v802
        %903 = vmatprep.subr.bf16.mxu0 %v805
        %904 = vmatpush1.bf16.msra.mxu0 %v804
        %905 = vmatprep.subr.bf16.mxu0 %v807
        %906 = vmatpush1.bf16.msra.mxu0 %v806
        %907 = vmatprep.subr.bf16.mxu0 %v809
        %908 = vmatpush1.bf16.msra.mxu0 %v808
        %909 = vmatprep.subr.bf16.mxu0 %v811
        %910 = vmatpush1.bf16.msra.mxu0 %v810
        %911 = vmatprep.subr.bf16.mxu0 %v813
        %912 = vmatpush1.bf16.msra.mxu0 %v812
        %913 = vmatprep.subr.bf16.mxu0 %v815
        %914 = vmatpush1.bf16.msra.mxu0 %v814
        %915 = vmatprep.subr.bf16.mxu0 %v817
        %916 = vmatpush1.bf16.msra.mxu0 %v816
        %917 = vmatprep.subr.bf16.mxu0 %v819
        %918 = vmatpush1.bf16.msra.mxu0 %v818
        %919 = vmatprep.subr.bf16.mxu0 %v821
        %920 = vmatpush1.bf16.msra.mxu0 %v820
        %921 = vmatprep.subr.bf16.mxu0 %v823
        %922 = vmatpush1.bf16.msra.mxu0 %v822
        %923 = vmatprep.subr.bf16.mxu0 %v825
        %924 = vmatpush1.bf16.msra.mxu0 %v824
        %925 = vmatprep.subr.bf16.mxu0 %v827
        %926 = vmatpush1.bf16.msra.mxu0 %v826
        %927 = vmatprep.mubr.bf16.mxu0 %v892
        %928 = vmatmul.mubr.bf16.gmra.mrb[0].mxu0 %v891
        %v929 = vpop.f32.mrb[0].mxu0
        %v930 = vadd.f32 %v882, %v929
        %v931 = vpop.f32.mrb[0].mxu0
        %v932 = vadd.f32 %v884, %v931
        %v933 = vpop.f32.mrb[0].mxu0
        %v934 = vpop.f32.mrb[0].mxu0
        %935 = vdwg.mxu0
        %v936 = vld [vmem:[%s4] sm:$0xff]
        %938 = vset.pattern.permute.xlu0 0
        %939 = vperm.xlu0 %938, %v936
        %v940 = vpop.permute.xlu0 %939
        %v942 = vadd.f32 %v930, %v940
        %v943 = vadd.f32 %v932, %v940
        %vm944 = vcmp.ge.f32.partialorder %v942, 0.0
        %vm945 = vcmp.ge.f32.partialorder %v943, 0.0
        %v946 = vmul.f32 %v942, 0.1
        %v947 = vmul.f32 %v943, 0.1
        %v948 = vsel %vm944, %v942, %v946
        %v949 = vsel %vm945, %v943, %v947
        %950 = vst [vmem:[%s322] sm:$0xff] %v948
        %951 = vst [vmem:[%s322 + $0x8] sm:$0xff] %v949
        %s952 = sand.u32 %s171, 1
        %s953 = scalar_lea.sflag [#allocation4], %s952
        %s954 = sand.u32 %s171, 1
        %s955 = smul.addr %s954, 16
        %s956 = scalar_lea.vmem [#allocation7], %s955
        // Predicated region
        $region49: #{tpu_custom_call.1} parent=39 // pred_check
          %p957 = pneg %p181
        $region50: #{tpu_custom_call.1} parent=39 // pred_check_branch
          %959 = sbr.rel (%p957) target = $region52
        $region51: #{tpu_custom_call.1} parent=39 // pred_region
          %s960 = smul.u32 2, %s30
          %s962 = ssub.s32 256, 256
          %963 = vsyncadd %s953, %s962
          %s964 = smul.addr %s29, 2
          %s965 = sadd.s32 %s960, %s964
          %s966 = smul.addr %s965, 128
          %s967 = scalar_lea.hbm %s5, %s966
          %s969 = sshll.u32 %s956, 4
          %s970 = int_to_ptr.vmem [resolvable:$true] %s969
          %972 = dma.vmem_to_hbm [thread:$0]  %s970, 256, %s967, %s953
        $region52: #{tpu_custom_call.1} parent=39 // pred_fallthru
          _
      $region40: #{tpu_custom_call.1} parent=5 // pred_fallthru
        _
      %p973 = scmp.le.s32.totalorder 2, %s20
      // Predicated region
      $region53: #{tpu_custom_call.1} parent=5 // pred_check
        %p974 = pneg %p973
      $region54: #{tpu_custom_call.1} parent=5 // pred_check_branch
        %976 = sbr.rel (%p974) target = $region56
      $region55: #{tpu_custom_call.1} parent=5 // pred_region
        %s977 = ssub.s32 %s20, 2
        // Predicated region
        $region57: #{tpu_custom_call.1} parent=55 // pred_check
          %p978 = pneg %p187
        $region58: #{tpu_custom_call.1} parent=55 // pred_check_branch
          %980 = sbr.rel (%p978) target = $region60
        $region59: #{tpu_custom_call.1} parent=55 // pred_region
          %s981 = sand.u32 %s172, 1
          %s982 = scalar_lea.sflag [#allocation4], %s981
          %s983 = sand.u32 %s172, 1
          %s984 = smul.addr %s983, 16
          %s985 = scalar_lea.vmem [#allocation7], %s984
          %986 = dma.done %s982, 256
        $region60: #{tpu_custom_call.1} parent=55 // pred_fallthru
          _
      $region56: #{tpu_custom_call.1} parent=5 // pred_fallthru
        _
    $region6: #{tpu_custom_call.1} parent=1 // loop_footer
      %s24 = sadd.s32 1, %s20
    $region7: #{tpu_custom_call.1} parent=1 // loop_footer_branch
      %19 = sbr.rel target = $region3
    $region8: #{tpu_custom_call.1} parent=1 // loop_exit
      _
    %987 = vsyncpa [#allocation3], 1
    %s988 = scalar_lea.sflag [#allocation3], 1
    %989 = vsyncpa %s988, 1
    %990 = vsyncpa [#allocation6], 1
    %s991 = scalar_lea.sflag [#allocation6], 1
    %992 = vsyncpa %s991, 1
    %993 = vsyncpa [#allocation4], 1
    %s994 = scalar_lea.sflag [#allocation4], 1
    %995 = vsyncpa %s994, 1

</llo_original>
